<compile_context>
chip_gen: v6e
topology: v6e:2x2x1
jax: 0.10.0
libtpu: 0.0.40
codegen_flags: <defaults>
</compile_context>

<pallas_src>
import functools

import jax
import jax.numpy as jnp
import numpy as np
from jax.experimental import pallas as pl
from jax.experimental.pallas import tpu as pltpu


def _round_up(x: int, m: int) -> int:
    return (x + m - 1) // m * m


def _cdiv(a: int, b: int) -> int:
    return (a + b - 1) // b


def actor_kernel(s_ref, w1_ref, b1_ref, w2_ref, b2_ref, w3_ref, b3_ref, o_ref):
    # Activations cast to bf16 only as matmul operands; accumulation and all
    # elementwise work (bias add / ReLU / tanh) stay float32.
    x = s_ref[...]                                                  # (TB, S) f32
    h1 = jnp.dot(x.astype(jnp.bfloat16), w1_ref[...],
                 preferred_element_type=jnp.float32)                # (TB, F1)
    h1 = jnp.maximum(h1 + b1_ref[...], 0.0)
    h2 = jnp.dot(h1.astype(jnp.bfloat16), w2_ref[...],
                 preferred_element_type=jnp.float32)                # (TB, F2)
    h2 = jnp.maximum(h2 + b2_ref[...], 0.0)
    h3 = jnp.dot(h2.astype(jnp.bfloat16), w3_ref[...],
                 preferred_element_type=jnp.float32)                # (TB, A)
    o_ref[...] = jnp.tanh(h3 + b3_ref[...])


@functools.partial(jax.jit, static_argnames=("tile_b",))
def actor_forward(state, params, *, tile_b: int = 512):
    """state: (B, state_size) f32 -> actions: (B, action_size) f32."""
    w1, b1, w2, b2, w3, b3 = params
    B, S = state.shape
    F1 = w1.shape[1]
    F2 = w2.shape[1]
    A = w3.shape[1]

    # Batch tile: big by default (amortize per-step overhead).  If the batch
    # fits in one tile, split it in two so v7x's second TensorCore gets work.
    tb_cap = max(8, _round_up(tile_b, 8))
    if B <= tb_cap:
        TB = max(8, _round_up(_cdiv(B, 2), 8))
    else:
        TB = tb_cap
    grid = (_cdiv(B, TB),)   # ragged last block handled by Pallas (no jnp.pad)

    # Weights/biases resident across the batch grid; only activations stream.
    in_specs = [
        pl.BlockSpec((TB, S),   lambda i: (i, 0)),   # state tile (f32)
        pl.BlockSpec((S, F1),   lambda i: (0, 0)),   # w1 (bf16)
        pl.BlockSpec((1, F1),   lambda i: (0, 0)),   # b1 (f32)
        pl.BlockSpec((F1, F2),  lambda i: (0, 0)),   # w2 (bf16)
        pl.BlockSpec((1, F2),   lambda i: (0, 0)),   # b2 (f32)
        pl.BlockSpec((F2, A),   lambda i: (0, 0)),   # w3 (bf16, unpadded)
        pl.BlockSpec((1, A),    lambda i: (0, 0)),   # b3 (f32, unpadded)
    ]
    out_specs = pl.BlockSpec((TB, A), lambda i: (i, 0))

    flops = 2 * B * (S * F1 + F1 * F2 + F2 * A)
    bytes_accessed = (
        B * S * 4                              # state in (f32)
        + (S * F1 + F1 * F2 + F2 * A) * 2      # weights (bf16)
        + (F1 + F2 + A) * 4                    # biases (f32)
        + B * A * 4                            # output (f32, unpadded)
    )

    out = pl.pallas_call(
        actor_kernel,
        out_shape=jax.ShapeDtypeStruct((B, A), jnp.float32),
        grid=grid,
        in_specs=in_specs,
        out_specs=out_specs,
        compiler_params=pltpu.CompilerParams(
            dimension_semantics=("parallel",)),       # megacore sharding on v7x
        cost_estimate=pl.CostEstimate(
            flops=flops,
            transcendentals=B * A,                    # tanh
            bytes_accessed=bytes_accessed),
    )(state, w1, b1, w2, b2, w3, b3)

    return out


def init_actor_params(key, state_size, action_size, fc1_units=256, fc2_units=128):
    """Deterministic init mirroring the PyTorch module's reset_parameters().

    hidden_init() uses weight.size()[0] == out_features as 'fan_in', so the
    limits are 1/sqrt(fc1_units) and 1/sqrt(fc2_units). fc3 weights are
    uniform(-3e-3, 3e-3). Biases keep the default nn.Linear init,
    uniform(-1/sqrt(in_features), 1/sqrt(in_features)).

    Weights are stored (in, out) and cast to bfloat16; biases stay float32.
    """
    ks = jax.random.split(key, 6)
    lim1 = 1.0 / np.sqrt(fc1_units)
    lim2 = 1.0 / np.sqrt(fc2_units)

    w1 = jax.random.uniform(ks[0], (state_size, fc1_units), jnp.float32, -lim1, lim1)
    w2 = jax.random.uniform(ks[1], (fc1_units, fc2_units), jnp.float32, -lim2, lim2)
    w3 = jax.random.uniform(ks[2], (fc2_units, action_size), jnp.float32, -3e-3, 3e-3)

    b1 = jax.random.uniform(ks[3], (1, fc1_units), jnp.float32,
                            -1.0 / np.sqrt(state_size), 1.0 / np.sqrt(state_size))
    b2 = jax.random.uniform(ks[4], (1, fc2_units), jnp.float32,
                            -1.0 / np.sqrt(fc1_units), 1.0 / np.sqrt(fc1_units))
    b3 = jax.random.uniform(ks[5], (1, action_size), jnp.float32,
                            -1.0 / np.sqrt(fc2_units), 1.0 / np.sqrt(fc2_units))

    return (w1.astype(jnp.bfloat16), b1,
            w2.astype(jnp.bfloat16), b2,
            w3.astype(jnp.bfloat16), b3)


def actor_reference(state, params):
    """Pure-JAX reference matching the kernel's math exactly:
    bf16 matmul operands, f32 accumulation and f32 elementwise."""
    w1, b1, w2, b2, w3, b3 = params
    x = jnp.dot(state.astype(jnp.bfloat16), w1, preferred_element_type=jnp.float32)
    x = jnp.maximum(x + b1, 0.0)
    x = jnp.dot(x.astype(jnp.bfloat16), w2, preferred_element_type=jnp.float32)
    x = jnp.maximum(x + b2, 0.0)
    x = jnp.dot(x.astype(jnp.bfloat16), w3, preferred_element_type=jnp.float32)
    return jnp.tanh(x + b3)


def actor_reference_f32(state, params):
    """Full-f32 reference (sanity check on the bf16 quantization error)."""
    w1, b1, w2, b2, w3, b3 = params
    x = jnp.maximum(state @ w1.astype(jnp.float32) + b1, 0.0)
    x = jnp.maximum(x @ w2.astype(jnp.float32) + b2, 0.0)
    return jnp.tanh(x @ w3.astype(jnp.float32) + b3)


if __name__ == "__main__":
    key = jax.random.PRNGKey(0)
    k_param, k_s1, k_s2, k_s3 = jax.random.split(key, 4)

    state_size = 16
    action_size = 8
    fc1_units = 256
    fc2_units = 128

    params = init_actor_params(k_param, state_size, action_size, fc1_units, fc2_units)

    # Case 1: small RL-style batch (B=8 -> single grid step).
    state_a = jax.random.normal(k_s1, (8, state_size), jnp.float32)
    out_a = jax.block_until_ready(actor_forward(state_a, params))
    ref_a = actor_reference(state_a, params)
    np.testing.assert_allclose(np.asarray(out_a), np.asarray(ref_a),
                               rtol=1e-4, atol=1e-4)
    np.testing.assert_allclose(np.asarray(out_a),
                               np.asarray(actor_reference_f32(state_a, params)),
                               rtol=3e-2, atol=3e-2)

    # Case 2: batch fits one tile but is split in two for megacore, with a
    # ragged last block (B=40 -> TB=24, grid=2, no host-side padding).
    state_b = jax.random.normal(k_s2, (40, state_size), jnp.float32)
    out_b = jax.block_until_ready(actor_forward(state_b, params))
    ref_b = actor_reference(state_b, params)
    np.testing.assert_allclose(np.asarray(out_b), np.asarray(ref_b),
                               rtol=1e-4, atol=1e-4)

    # Case 3: learner-style batch larger than the tile, non-multiple of TB
    # (B=600, tile_b=256 -> grid=3 with a ragged last block).
    state_c = jax.random.normal(k_s3, (600, state_size), jnp.float32)
    out_c = jax.block_until_ready(actor_forward(state_c, params, tile_b=256))
    ref_c = actor_reference(state_c, params)
    np.testing.assert_allclose(np.asarray(out_c), np.asarray(ref_c),
                               rtol=1e-4, atol=1e-4)

    print("KERNEL_OK")
</pallas_src>

<mosaic_0001>
module attributes {stable_mosaic.version = 11 : i64} {
  func.func @actor_kernel(%arg0: i32, %arg1: memref<8x16xf32, #tpu.memory_space<vmem>>, %arg2: memref<16x256xbf16, #tpu.memory_space<vmem>>, %arg3: memref<1x256xf32, #tpu.memory_space<vmem>>, %arg4: memref<256x128xbf16, #tpu.memory_space<vmem>>, %arg5: memref<1x128xf32, #tpu.memory_space<vmem>>, %arg6: memref<128x8xbf16, #tpu.memory_space<vmem>>, %arg7: memref<1x8xf32, #tpu.memory_space<vmem>>, %arg8: memref<8x8xf32, #tpu.memory_space<vmem>>) attributes {dimension_semantics = [#tpu.dimension_semantics<parallel>], iteration_bounds = array<i64: 1>, scalar_prefetch = 0 : i64, scratch_operands = 0 : i64, tpu.core_type = #tpu.core_type<tc>, window_params = [{transform_indices = @transform_0, window_bounds = array<i64: 8, 16>}, {pipeline_mode = #tpu.pipeline_mode<synchronous>, transform_indices = @transform_1, window_bounds = array<i64: 16, 256>}, {pipeline_mode = #tpu.pipeline_mode<synchronous>, transform_indices = @transform_2, window_bounds = array<i64: 1, 256>}, {pipeline_mode = #tpu.pipeline_mode<synchronous>, transform_indices = @transform_3, window_bounds = array<i64: 256, 128>}, {pipeline_mode = #tpu.pipeline_mode<synchronous>, transform_indices = @transform_4, window_bounds = array<i64: 1, 128>}, {pipeline_mode = #tpu.pipeline_mode<synchronous>, transform_indices = @transform_5, window_bounds = array<i64: 128, 8>}, {pipeline_mode = #tpu.pipeline_mode<synchronous>, transform_indices = @transform_6, window_bounds = array<i64: 1, 8>}, {transform_indices = @transform_7, window_bounds = array<i64: 8, 8>}]} {
    %c0 = arith.constant 0 : index
    %c0_0 = arith.constant 0 : index
    %0 = vector.load %arg1[%c0, %c0_0] : memref<8x16xf32, #tpu.memory_space<vmem>>, vector<8x16xf32>
    %1 = arith.truncf %0 : vector<8x16xf32> to vector<8x16xbf16>
    %c0_1 = arith.constant 0 : index
    %c0_2 = arith.constant 0 : index
    %2 = vector.load %arg2[%c0_1, %c0_2] : memref<16x256xbf16, #tpu.memory_space<vmem>>, vector<16x256xbf16>
    %cst = arith.constant dense<0.000000e+00> : vector<8x256xf32>
    %3 = tpu.matmul %1, %2, %cst {dimension_numbers = #tpu.dot_dimension_numbers<[1], [0], [0], [1], [0, 0, 1, 1], [], []>} : vector<8x16xbf16>, vector<16x256xbf16>, vector<8x256xf32> -> vector<8x256xf32>
    %c0_3 = arith.constant 0 : index
    %c0_4 = arith.constant 0 : index
    %4 = vector.load %arg3[%c0_3, %c0_4] : memref<1x256xf32, #tpu.memory_space<vmem>>, vector<1x256xf32>
    %5 = vector.broadcast %4 : vector<1x256xf32> to vector<8x256xf32>
    %6 = arith.addf %3, %5 : vector<8x256xf32>
    %cst_5 = arith.constant 0.000000e+00 : f32
    %7 = vector.broadcast %cst_5 : f32 to vector<8x256xf32>
    %8 = arith.maximumf %6, %7 : vector<8x256xf32>
    %9 = arith.truncf %8 : vector<8x256xf32> to vector<8x256xbf16>
    %c0_6 = arith.constant 0 : index
    %c0_7 = arith.constant 0 : index
    %10 = vector.load %arg4[%c0_6, %c0_7] : memref<256x128xbf16, #tpu.memory_space<vmem>>, vector<256x128xbf16>
    %cst_8 = arith.constant dense<0.000000e+00> : vector<8x128xf32>
    %11 = tpu.matmul %9, %10, %cst_8 {dimension_numbers = #tpu.dot_dimension_numbers<[1], [0], [0], [1], [0, 0, 1, 1], [], []>} : vector<8x256xbf16>, vector<256x128xbf16>, vector<8x128xf32> -> vector<8x128xf32>
    %c0_9 = arith.constant 0 : index
    %c0_10 = arith.constant 0 : index
    %12 = vector.load %arg5[%c0_9, %c0_10] : memref<1x128xf32, #tpu.memory_space<vmem>>, vector<1x128xf32>
    %13 = vector.broadcast %12 : vector<1x128xf32> to vector<8x128xf32>
    %14 = arith.addf %11, %13 : vector<8x128xf32>
    %cst_11 = arith.constant 0.000000e+00 : f32
    %15 = vector.broadcast %cst_11 : f32 to vector<8x128xf32>
    %16 = arith.maximumf %14, %15 : vector<8x128xf32>
    %17 = arith.truncf %16 : vector<8x128xf32> to vector<8x128xbf16>
    %c0_12 = arith.constant 0 : index
    %c0_13 = arith.constant 0 : index
    %18 = vector.load %arg6[%c0_12, %c0_13] : memref<128x8xbf16, #tpu.memory_space<vmem>>, vector<128x8xbf16>
    %cst_14 = arith.constant dense<0.000000e+00> : vector<8x8xf32>
    %19 = tpu.matmul %17, %18, %cst_14 {dimension_numbers = #tpu.dot_dimension_numbers<[1], [0], [0], [1], [0, 0, 1, 1], [], []>} : vector<8x128xbf16>, vector<128x8xbf16>, vector<8x8xf32> -> vector<8x8xf32>
    %c0_15 = arith.constant 0 : index
    %c0_16 = arith.constant 0 : index
    %20 = vector.load %arg7[%c0_15, %c0_16] : memref<1x8xf32, #tpu.memory_space<vmem>>, vector<1x8xf32>
    %21 = vector.broadcast %20 : vector<1x8xf32> to vector<8x8xf32>
    %22 = arith.addf %19, %21 : vector<8x8xf32>
    %23 = math.tanh %22 : vector<8x8xf32>
    %c0_17 = arith.constant 0 : index
    %c0_18 = arith.constant 0 : index
    %24 = vector.load %arg8[%c0_17, %c0_18] : memref<8x8xf32, #tpu.memory_space<vmem>>, vector<8x8xf32>
    tpu.vector_store %arg8[%c0_17, %c0_18], %23 {strides = array<i32>} : memref<8x8xf32, #tpu.memory_space<vmem>>, vector<8x8xf32>,
    return
  }
  func.func @transform_0(%arg0: i32) -> (i32, i32) {
    %c0_i32 = arith.constant 0 : i32
    %c0_i32_0 = arith.constant 0 : i32
    return %arg0, %c0_i32 : i32, i32
  }
  func.func @transform_1(%arg0: i32) -> (i32, i32) {
    %c0_i32 = arith.constant 0 : i32
    %c0_i32_0 = arith.constant 0 : i32
    %c0_i32_1 = arith.constant 0 : i32
    return %c0_i32, %c0_i32_0 : i32, i32
  }
  func.func @transform_2(%arg0: i32) -> (i32, i32) {
    %c0_i32 = arith.constant 0 : i32
    %c0_i32_0 = arith.constant 0 : i32
    %c0_i32_1 = arith.constant 0 : i32
    return %c0_i32, %c0_i32_0 : i32, i32
  }
  func.func @transform_3(%arg0: i32) -> (i32, i32) {
    %c0_i32 = arith.constant 0 : i32
    %c0_i32_0 = arith.constant 0 : i32
    %c0_i32_1 = arith.constant 0 : i32
    return %c0_i32, %c0_i32_0 : i32, i32
  }
  func.func @transform_4(%arg0: i32) -> (i32, i32) {
    %c0_i32 = arith.constant 0 : i32
    %c0_i32_0 = arith.constant 0 : i32
    %c0_i32_1 = arith.constant 0 : i32
    return %c0_i32, %c0_i32_0 : i32, i32
  }
  func.func @transform_5(%arg0: i32) -> (i32, i32) {
    %c0_i32 = arith.constant 0 : i32
    %c0_i32_0 = arith.constant 0 : i32
    %c0_i32_1 = arith.constant 0 : i32
    return %c0_i32, %c0_i32_0 : i32, i32
  }
  func.func @transform_6(%arg0: i32) -> (i32, i32) {
    %c0_i32 = arith.constant 0 : i32
    %c0_i32_0 = arith.constant 0 : i32
    %c0_i32_1 = arith.constant 0 : i32
    return %c0_i32, %c0_i32_0 : i32, i32
  }
  func.func @transform_7(%arg0: i32) -> (i32, i32) {
    %c0_i32 = arith.constant 0 : i32
    %c0_i32_0 = arith.constant 0 : i32
    return %arg0, %c0_i32 : i32, i32
  }
}

</mosaic_0001>

<llo_original>
// kernel: actor_forward.1
$region0: #{actor_forward.1}
  #allocation0 [shape = 'u32[]', space=smem, size = 0x4, offset = 0x4, fixed_abs, tag = 'smem constant byte address 0x4 - core index']
  #allocation1 [shape = 'u32[144,128]{1,0:T(1,128)}', space=vmem, size = 0x12000, scoped, tag = 'internal scratch']
  %s0 = inlined_call_operand.vmem [shape: f32[8,16], index: 0, kind: input, shape index: {}]
  %s1 = inlined_call_operand.vmem [shape: bf16[16,256], index: 1, kind: input, shape index: {}]
  %s2 = inlined_call_operand.vmem [shape: f32[1,256], index: 2, kind: input, shape index: {}]
  %s3 = inlined_call_operand.hbm [shape: bf16[256,128], index: 3, kind: input, shape index: {}]
  %s4 = inlined_call_operand.vmem [shape: f32[1,128], index: 4, kind: input, shape index: {}]
  %s5 = inlined_call_operand.vmem [shape: bf16[128,8], index: 5, kind: input, shape index: {}]
  %s6 = inlined_call_operand.vmem [shape: f32[1,8], index: 6, kind: input, shape index: {}]
  %s7 = inlined_call_operand.hbm [shape: f32[8,8], index: 7, kind: output, shape index: {}]
  %s8 = sld [smem:[#allocation0]]
  $region42: #{actor_forward.1} parent=0
    _
  %s10 = ssub.s32 1, %s8
  %s11 = scalar_select 0, %s10, %s8
  $region1: #{actor_forward.1} parent=0
    #allocation2 [shape = 'u8[65536]{0}', space=vmem, size = 0x10000, scoped, tag = 'input window, operand 3, single buffered']
    #allocation3 [shape = 's32[1]{0}', space=sflag, size = 0x4, scoped, tag = 'scoped memory for actor_forward.1']
    #allocation4 [shape = 's32[1]{0}', space=sflag, size = 0x4, scoped, tag = 'scoped memory for actor_forward.1']
    #allocation5 [shape = 'u8[4096]{0}', space=vmem, size = 0x1000, scoped, tag = 'output window, operand 0, single buffered']
    %12 = vsyncpa [#allocation3], 0
    %13 = vsyncpa [#allocation4], 0
    // Predicated region
    $region2: #{actor_forward.1} parent=1 // pred_check
      _
    $region3: #{actor_forward.1} parent=1 // pred_check_branch
      %15 = sbr.rel (0) target = $region5
    $region4: #{actor_forward.1} parent=1 // pred_region
      _
    $region5: #{actor_forward.1} parent=1 // pred_fallthru
      _
    // Predicated region
    $region6: #{actor_forward.1} parent=1 // pred_check
      _
    $region7: #{actor_forward.1} parent=1 // pred_check_branch
      %17 = sbr.rel (0) target = $region9
    $region8: #{actor_forward.1} parent=1 // pred_region
      _
    $region9: #{actor_forward.1} parent=1 // pred_fallthru
      _
    // Predicated region
    $region10: #{actor_forward.1} parent=1 // pred_check
      _
    $region11: #{actor_forward.1} parent=1 // pred_check_branch
      %19 = sbr.rel (0) target = $region13
    $region12: #{actor_forward.1} parent=1 // pred_region
      _
    $region13: #{actor_forward.1} parent=1 // pred_fallthru
      _
    // Predicated region
    $region14: #{actor_forward.1} parent=1 // pred_check
      _
    $region15: #{actor_forward.1} parent=1 // pred_check_branch
      %21 = sbr.rel (0) target = $region17
    $region16: #{actor_forward.1} parent=1 // pred_region
      %s23 = ssub.s32 2048, 2048
      %24 = vsyncadd [#allocation3], %s23
      %s25 = sshll.u32 [#allocation2], 4
      %s26 = int_to_ptr.vmem [resolvable:$true] %s25
      %31 = dma.hbm_to_vmem [thread:$0]  %s3, 2048, %s26, [#allocation3], 64, 64, 4
    $region17: #{actor_forward.1} parent=1 // pred_fallthru
      _
    // Predicated region
    $region18: #{actor_forward.1} parent=1 // pred_check
      _
    $region19: #{actor_forward.1} parent=1 // pred_check_branch
      %33 = sbr.rel (0) target = $region21
    $region20: #{actor_forward.1} parent=1 // pred_region
      _
    $region21: #{actor_forward.1} parent=1 // pred_fallthru
      _
    // Predicated region
    $region22: #{actor_forward.1} parent=1 // pred_check
      _
    $region23: #{actor_forward.1} parent=1 // pred_check_branch
      %35 = sbr.rel (0) target = $region25
    $region24: #{actor_forward.1} parent=1 // pred_region
      _
    $region25: #{actor_forward.1} parent=1 // pred_fallthru
      _
    // Predicated region
    $region26: #{actor_forward.1} parent=1 // pred_check
      _
    $region27: #{actor_forward.1} parent=1 // pred_check_branch
      %37 = sbr.rel (0) target = $region29
    $region28: #{actor_forward.1} parent=1 // pred_region
      _
    $region29: #{actor_forward.1} parent=1 // pred_fallthru
      _
    // Predicated region
    $region30: #{actor_forward.1} parent=1 // pred_check
      _
    $region31: #{actor_forward.1} parent=1 // pred_check_branch
      %39 = sbr.rel (0) target = $region33
    $region32: #{actor_forward.1} parent=1 // pred_region
      %40 = dma.done [#allocation3], 2048
    $region33: #{actor_forward.1} parent=1 // pred_fallthru
      _
    %v42 = vld [vmem:[%s0] sm:$0xff]
    %v43 = vpack.c.bf16 %v42, %v42
    %v44 = vld [vmem:[%s1] sm:$0xff]
    %v45 = vld [vmem:[%s1 + $0x8] sm:$0xff]
    %v46 = vld [vmem:[%s2] sm:$0x3]
    %v48 = vlaneseq
    %v49 = vshrl.u32 %v48, 7
    %v50 = vsub.s32 0, %v49
    %v51 = vrot.slane %v46, %v50
    %v52 = vlaneseq
    %v53 = vshrl.u32 %v52, 7
    %v54 = vsub.s32 1, %v53
    %v55 = vrot.slane %v46, %v54
    %v60 = vunpack.c.l.b16 %v44
    %v61 = vunpack.c.h.b16 %v44
    %v62 = vunpack.c.l.b16 %v45
    %v63 = vunpack.c.h.b16 %v45
    %v64 = vpack.c.b16 %v62, %v60
    %v65 = vpack.c.b16 %v63, %v61
    %vm68 = vcmask 130048
    %v70 = vsel %vm68, %v43, 0
    %72 = vmatprep.subr.bf16.mxu0 0
    %73 = vmatpush1.bf16.msra.mxu0 0
    %74 = vmatprep.subr.bf16.mxu0 0
    %75 = vmatpush1.bf16.msra.mxu0 0
    %76 = vmatprep.subr.bf16.mxu0 0
    %77 = vmatpush1.bf16.msra.mxu0 0
    %78 = vmatprep.subr.bf16.mxu0 0
    %79 = vmatpush1.bf16.msra.mxu0 0
    %80 = vmatprep.subr.bf16.mxu0 0
    %81 = vmatpush1.bf16.msra.mxu0 0
    %82 = vmatprep.subr.bf16.mxu0 0
    %83 = vmatpush1.bf16.msra.mxu0 0
    %84 = vmatprep.subr.bf16.mxu0 0
    %85 = vmatpush1.bf16.msra.mxu0 0
    %86 = vmatprep.subr.bf16.mxu0 %v65
    %87 = vmatpush1.bf16.msra.mxu0 %v64
    %88 = vmatprep.subr.bf16.mxu0 0
    %89 = vmatpush2.bf16.msra.mxu0 0
    %90 = vmatprep.subr.bf16.mxu0 0
    %91 = vmatpush2.bf16.msra.mxu0 0
    %92 = vmatprep.subr.bf16.mxu0 0
    %93 = vmatpush2.bf16.msra.mxu0 0
    %94 = vmatprep.subr.bf16.mxu0 0
    %95 = vmatpush2.bf16.msra.mxu0 0
    %96 = vmatprep.subr.bf16.mxu0 0
    %97 = vmatpush2.bf16.msra.mxu0 0
    %98 = vmatprep.subr.bf16.mxu0 0
    %99 = vmatpush2.bf16.msra.mxu0 0
    %100 = vmatprep.subr.bf16.mxu0 0
    %101 = vmatpush2.bf16.msra.mxu0 0
    %102 = vmatprep.subr.bf16.mxu0 0
    %103 = vmatpush2.bf16.msra.mxu0 0
    %104 = vmatprep.mubr.bf16.mxu0 0
    %105 = vmatmul.mubr.bf16.gmra.mxu0 %v70
    %v106 = vpop.f32.mrf.mxu0
    %v107 = vadd.f32 %v51, %v106
    %v108 = vpop.f32.mrf.mxu0
    %v109 = vadd.f32 %v55, %v108
    %v110 = vpop.f32.mrf.mxu0
    %v111 = vpop.f32.mrf.mxu0
    %112 = vdwg.mxu0
    %v113 = vmax.f32 %v107, 0.0
    %v114 = vmax.f32 %v109, 0.0
    %v115 = vpack.c.bf16 %v113, %v113
    %v116 = vpack.c.bf16 %v114, %v114
    %v117 = vld [vmem:[#allocation2] sm:$0xf]
    %v118 = vld [vmem:[#allocation2 + $0x4] sm:$0xf]
    %v119 = vld [vmem:[#allocation2 + $0x8] sm:$0xf]
    %v120 = vld [vmem:[#allocation2 + $0xc] sm:$0xf]
    %v121 = vld [vmem:[#allocation2 + $0x10] sm:$0xf]
    %v122 = vld [vmem:[#allocation2 + $0x14] sm:$0xf]
    %v123 = vld [vmem:[#allocation2 + $0x18] sm:$0xf]
    %v124 = vld [vmem:[#allocation2 + $0x1c] sm:$0xf]
    %v125 = vld [vmem:[#allocation2 + $0x20] sm:$0xf]
    %v126 = vld [vmem:[#allocation2 + $0x24] sm:$0xf]
    %v127 = vld [vmem:[#allocation2 + $0x28] sm:$0xf]
    %v128 = vld [vmem:[#allocation2 + $0x2c] sm:$0xf]
    %v129 = vld [vmem:[#allocation2 + $0x30] sm:$0xf]
    %v130 = vld [vmem:[#allocation2 + $0x34] sm:$0xf]
    %v131 = vld [vmem:[#allocation2 + $0x38] sm:$0xf]
    %v132 = vld [vmem:[#allocation2 + $0x3c] sm:$0xf]
    %v133 = vld [vmem:[#allocation2 + $0x40] sm:$0xf]
    %v134 = vld [vmem:[#allocation2 + $0x44] sm:$0xf]
    %v135 = vld [vmem:[#allocation2 + $0x48] sm:$0xf]
    %v136 = vld [vmem:[#allocation2 + $0x4c] sm:$0xf]
    %v137 = vld [vmem:[#allocation2 + $0x50] sm:$0xf]
    %v138 = vld [vmem:[#allocation2 + $0x54] sm:$0xf]
    %v139 = vld [vmem:[#allocation2 + $0x58] sm:$0xf]
    %v140 = vld [vmem:[#allocation2 + $0x5c] sm:$0xf]
    %v141 = vld [vmem:[#allocation2 + $0x60] sm:$0xf]
    %v142 = vld [vmem:[#allocation2 + $0x64] sm:$0xf]
    %v143 = vld [vmem:[#allocation2 + $0x68] sm:$0xf]
    %v144 = vld [vmem:[#allocation2 + $0x6c] sm:$0xf]
    %v145 = vld [vmem:[#allocation2 + $0x70] sm:$0xf]
    %v146 = vld [vmem:[#allocation2 + $0x74] sm:$0xf]
    %v147 = vld [vmem:[#allocation2 + $0x78] sm:$0xf]
    %v148 = vld [vmem:[#allocation2 + $0x7c] sm:$0xf]
    %v149 = vld [vmem:[%s4] sm:$0x1]
    %v151 = vlaneseq
    %v152 = vshrl.u32 %v151, 7
    %v153 = vsub.s32 0, %v152
    %v154 = vrot.slane %v149, %v153
    %v188 = vunpack.c.l.b16 %v117
    %v189 = vunpack.c.l.b16 %v118
    %v190 = vunpack.c.l.b16 %v119
    %v191 = vunpack.c.l.b16 %v120
    %v192 = vunpack.c.l.b16 %v121
    %v193 = vunpack.c.l.b16 %v122
    %v194 = vunpack.c.l.b16 %v123
    %v195 = vunpack.c.l.b16 %v124
    %v196 = vunpack.c.l.b16 %v125
    %v197 = vunpack.c.l.b16 %v126
    %v198 = vunpack.c.l.b16 %v127
    %v199 = vunpack.c.l.b16 %v128
    %v200 = vunpack.c.l.b16 %v129
    %v201 = vunpack.c.l.b16 %v130
    %v202 = vunpack.c.l.b16 %v131
    %v203 = vunpack.c.l.b16 %v132
    %v204 = vunpack.c.l.b16 %v133
    %v205 = vunpack.c.l.b16 %v134
    %v206 = vunpack.c.l.b16 %v135
    %v207 = vunpack.c.l.b16 %v136
    %v208 = vunpack.c.l.b16 %v137
    %v209 = vunpack.c.l.b16 %v138
    %v210 = vunpack.c.l.b16 %v139
    %v211 = vunpack.c.l.b16 %v140
    %v212 = vunpack.c.l.b16 %v141
    %v213 = vunpack.c.l.b16 %v142
    %v214 = vunpack.c.l.b16 %v143
    %v215 = vunpack.c.l.b16 %v144
    %v216 = vunpack.c.l.b16 %v145
    %v217 = vunpack.c.l.b16 %v146
    %v218 = vunpack.c.l.b16 %v147
    %v219 = vunpack.c.l.b16 %v148
    %v220 = vpack.c.b16 %v189, %v188
    %v221 = vpack.c.b16 %v191, %v190
    %v222 = vpack.c.b16 %v193, %v192
    %v223 = vpack.c.b16 %v195, %v194
    %v224 = vpack.c.b16 %v197, %v196
    %v225 = vpack.c.b16 %v199, %v198
    %v226 = vpack.c.b16 %v201, %v200
    %v227 = vpack.c.b16 %v203, %v202
    %v228 = vpack.c.b16 %v205, %v204
    %v229 = vpack.c.b16 %v207, %v206
    %v230 = vpack.c.b16 %v209, %v208
    %v231 = vpack.c.b16 %v211, %v210
    %v232 = vpack.c.b16 %v213, %v212
    %v233 = vpack.c.b16 %v215, %v214
    %v234 = vpack.c.b16 %v217, %v216
    %v235 = vpack.c.b16 %v219, %v218
    %252 = vmatprep.subr.bf16.mxu0 0
    %253 = vmatpush1.bf16.msra.mxu0 %v227
    %254 = vmatprep.subr.bf16.mxu0 0
    %255 = vmatpush1.bf16.msra.mxu0 %v226
    %256 = vmatprep.subr.bf16.mxu0 0
    %257 = vmatpush1.bf16.msra.mxu0 %v225
    %258 = vmatprep.subr.bf16.mxu0 0
    %259 = vmatpush1.bf16.msra.mxu0 %v224
    %260 = vmatprep.subr.bf16.mxu0 0
    %261 = vmatpush1.bf16.msra.mxu0 %v223
    %262 = vmatprep.subr.bf16.mxu0 0
    %263 = vmatpush1.bf16.msra.mxu0 %v222
    %264 = vmatprep.subr.bf16.mxu0 0
    %265 = vmatpush1.bf16.msra.mxu0 %v221
    %266 = vmatprep.subr.bf16.mxu0 0
    %267 = vmatpush1.bf16.msra.mxu0 %v220
    %268 = vmatprep.subr.bf16.mxu0 0
    %269 = vmatpush2.bf16.msra.mxu0 %v235
    %270 = vmatprep.subr.bf16.mxu0 0
    %271 = vmatpush2.bf16.msra.mxu0 %v234
    %272 = vmatprep.subr.bf16.mxu0 0
    %273 = vmatpush2.bf16.msra.mxu0 %v233
    %274 = vmatprep.subr.bf16.mxu0 0
    %275 = vmatpush2.bf16.msra.mxu0 %v232
    %276 = vmatprep.subr.bf16.mxu0 0
    %277 = vmatpush2.bf16.msra.mxu0 %v231
    %278 = vmatprep.subr.bf16.mxu0 0
    %279 = vmatpush2.bf16.msra.mxu0 %v230
    %280 = vmatprep.subr.bf16.mxu0 0
    %281 = vmatpush2.bf16.msra.mxu0 %v229
    %282 = vmatprep.subr.bf16.mxu0 0
    %283 = vmatpush2.bf16.msra.mxu0 %v228
    %284 = vmatprep.mubr.bf16.mxu0 %v116
    %285 = vmatmul.mubr.bf16.gmra.mxu0 %v115
    %v286 = vpop.f32.mrf.mxu0
    %v287 = vadd.f32 %v154, %v286
    %v288 = vpop.f32.mrf.mxu0
    %v289 = vpop.f32.mrf.mxu0
    %v290 = vpop.f32.mrf.mxu0
    %291 = vdwg.mxu0
    %v292 = vmax.f32 %v287, 0.0
    %v293 = vpack.c.bf16 %v292, %v292
    %v294 = vld [vmem:[%s5] sm:$0xf]
    %v295 = vld [vmem:[%s5 + $0x4] sm:$0xf]
    %v296 = vld [vmem:[%s5 + $0x8] sm:$0xf]
    %v297 = vld [vmem:[%s5 + $0xc] sm:$0xf]
    %v298 = vld [vmem:[%s5 + $0x10] sm:$0xf]
    %v299 = vld [vmem:[%s5 + $0x14] sm:$0xf]
    %v300 = vld [vmem:[%s5 + $0x18] sm:$0xf]
    %v301 = vld [vmem:[%s5 + $0x1c] sm:$0xf]
    %v302 = vld [vmem:[%s5 + $0x20] sm:$0xf]
    %v303 = vld [vmem:[%s5 + $0x24] sm:$0xf]
    %v304 = vld [vmem:[%s5 + $0x28] sm:$0xf]
    %v305 = vld [vmem:[%s5 + $0x2c] sm:$0xf]
    %v306 = vld [vmem:[%s5 + $0x30] sm:$0xf]
    %v307 = vld [vmem:[%s5 + $0x34] sm:$0xf]
    %v308 = vld [vmem:[%s5 + $0x38] sm:$0xf]
    %v309 = vld [vmem:[%s5 + $0x3c] sm:$0xf]
    %v310 = vld [vmem:[%s6] sm:$0x1]
    %v312 = vlaneseq
    %v313 = vshrl.u32 %v312, 7
    %v314 = vsub.s32 0, %v313
    %v315 = vrot.slane %v310, %v314
    %v333 = vunpack.c.l.b16 %v294
    %v334 = vunpack.c.l.b16 %v295
    %v335 = vunpack.c.l.b16 %v296
    %v336 = vunpack.c.l.b16 %v297
    %v337 = vunpack.c.l.b16 %v298
    %v338 = vunpack.c.l.b16 %v299
    %v339 = vunpack.c.l.b16 %v300
    %v340 = vunpack.c.l.b16 %v301
    %v341 = vunpack.c.l.b16 %v302
    %v342 = vunpack.c.l.b16 %v303
    %v343 = vunpack.c.l.b16 %v304
    %v344 = vunpack.c.l.b16 %v305
    %v345 = vunpack.c.l.b16 %v306
    %v346 = vunpack.c.l.b16 %v307
    %v347 = vunpack.c.l.b16 %v308
    %v348 = vunpack.c.l.b16 %v309
    %v349 = vpack.c.b16 %v334, %v333
    %v350 = vpack.c.b16 %v336, %v335
    %v351 = vpack.c.b16 %v338, %v337
    %v352 = vpack.c.b16 %v340, %v339
    %v353 = vpack.c.b16 %v342, %v341
    %v354 = vpack.c.b16 %v344, %v343
    %v355 = vpack.c.b16 %v346, %v345
    %v356 = vpack.c.b16 %v348, %v347
    %365 = vmatprep.subr.bf16.mxu0 0
    %366 = vmatpush1.bf16.msra.mxu0 %v356
    %367 = vmatprep.subr.bf16.mxu0 0
    %368 = vmatpush1.bf16.msra.mxu0 %v355
    %369 = vmatprep.subr.bf16.mxu0 0
    %370 = vmatpush1.bf16.msra.mxu0 %v354
    %371 = vmatprep.subr.bf16.mxu0 0
    %372 = vmatpush1.bf16.msra.mxu0 %v353
    %373 = vmatprep.subr.bf16.mxu0 0
    %374 = vmatpush1.bf16.msra.mxu0 %v352
    %375 = vmatprep.subr.bf16.mxu0 0
    %376 = vmatpush1.bf16.msra.mxu0 %v351
    %377 = vmatprep.subr.bf16.mxu0 0
    %378 = vmatpush1.bf16.msra.mxu0 %v350
    %379 = vmatprep.subr.bf16.mxu0 0
    %380 = vmatpush1.bf16.msra.mxu0 %v349
    %381 = vmatprep.subr.bf16.mxu0 0
    %382 = vmatpush2.bf16.msra.mxu0 0
    %383 = vmatprep.subr.bf16.mxu0 0
    %384 = vmatpush2.bf16.msra.mxu0 0
    %385 = vmatprep.subr.bf16.mxu0 0
    %386 = vmatpush2.bf16.msra.mxu0 0
    %387 = vmatprep.subr.bf16.mxu0 0
    %388 = vmatpush2.bf16.msra.mxu0 0
    %389 = vmatprep.subr.bf16.mxu0 0
    %390 = vmatpush2.bf16.msra.mxu0 0
    %391 = vmatprep.subr.bf16.mxu0 0
    %392 = vmatpush2.bf16.msra.mxu0 0
    %393 = vmatprep.subr.bf16.mxu0 0
    %394 = vmatpush2.bf16.msra.mxu0 0
    %395 = vmatprep.subr.bf16.mxu0 0
    %396 = vmatpush2.bf16.msra.mxu0 0
    %397 = vmatprep.mubr.bf16.mxu0 0
    %398 = vmatmul.mubr.bf16.gmra.mxu0 %v293
    %v399 = vpop.f32.mrf.mxu0
    %v400 = vadd.f32 %v315, %v399
    %v401 = vpop.f32.mrf.mxu0
    %v402 = vpop.f32.mrf.mxu0
    %v403 = vpop.f32.mrf.mxu0
    %404 = vdwg.mxu0
    %v405 = vtanh.pop %v400
    %vm406 = vcmask 64512
    %407 = vst.msk [vmem:[#allocation5] sm:$0xff] %vm406, %v405
    // Predicated region
    $region34: #{actor_forward.1} parent=1 // pred_check
      _
    $region35: #{actor_forward.1} parent=1 // pred_check_branch
      %409 = sbr.rel (0) target = $region37
    $region36: #{actor_forward.1} parent=1 // pred_region
      %s411 = ssub.s32 128, 128
      %412 = vsyncadd [#allocation4], %s411
      %s414 = sshll.u32 [#allocation5], 4
      %s415 = int_to_ptr.vmem [resolvable:$true] %s414
      %417 = dma.vmem_to_hbm [thread:$0]  %s415, 128, %s7, [#allocation4]
    $region37: #{actor_forward.1} parent=1 // pred_fallthru
      _
    // Predicated region
    $region38: #{actor_forward.1} parent=1 // pred_check
      _
    $region39: #{actor_forward.1} parent=1 // pred_check_branch
      %419 = sbr.rel (0) target = $region41
    $region40: #{actor_forward.1} parent=1 // pred_region
      %420 = dma.done [#allocation4], 128
    $region41: #{actor_forward.1} parent=1 // pred_fallthru
      _
    %421 = vsyncpa [#allocation3], 1
    %422 = vsyncpa [#allocation4], 1

</llo_original>
